<compile_context>
chip_gen: v6e
topology: v6e:2x2x1
jax: 0.10.0
libtpu: 0.0.40
codegen_flags: <defaults>
</compile_context>

<pallas_src>
import jax
import jax.numpy as jnp
from jax.experimental import pallas as pl
from jax.experimental.pallas import tpu as pltpu


_NEG_BIG = jnp.float32(-1e30)  # padded-class logit; exp() underflows to 0


def _pointnet_c_kernel(x_ref, w1_ref, b1_ref, w2_ref, b2_ref,
                       h_ref, logits_ref, probs_ref):
    x = x_ref[...]                                             # (TB, in_dim) f32

    # bottleneck: Linear(in_dim -> bottle_neck_dim)
    h = jnp.dot(x, w1_ref[...],
                preferred_element_type=jnp.float32) + b1_ref[...]
    h_ref[...] = h

    # fc: Linear(bottle_neck_dim -> num_class), padded to 128 lanes.
    # Padded weight columns are 0 and padded bias lanes are -1e30, so the
    # padded logits contribute exactly 0 to the softmax below.
    logits = jnp.dot(h, w2_ref[...],
                     preferred_element_type=jnp.float32) + b2_ref[...]
    logits_ref[...] = logits

    # Softmax(dim=-1), numerically stable.
    m = jnp.max(logits, axis=-1, keepdims=True)
    e = jnp.exp(logits - m)
    denom = jnp.sum(e, axis=-1, keepdims=True)
    probs_ref[...] = e * pl.reciprocal(denom, approx=True)


def pointnet_c_forward(x, w1, b1, w2, b2):
    """Fused kernel; returns [x, h, logits, probs] like the nn.Module."""
    B, in_dim = x.shape
    bottle = w1.shape[1]
    num_class = w2.shape[1]

    # ----- lane-dense padding for the narrow (num_class) outputs -----
    npad = max(128, pl.cdiv(num_class, 128) * 128)
    w2_p = jnp.zeros((bottle, npad), jnp.float32).at[:, :num_class].set(w2)
    b2_p = jnp.full((1, npad), _NEG_BIG, jnp.float32).at[0, :num_class].set(b2)
    b1_r = b1.reshape(1, bottle)

    # ----- batch tiling: big tiles, multiple of 8 sublanes -----
    TB = 512
    if B < TB:
        TB = pl.cdiv(B, 8) * 8          # small batch: single tile, 8-aligned
    B_pad = pl.cdiv(B, TB) * TB
    if B_pad != B:
        x_in = jnp.zeros((B_pad, in_dim), x.dtype).at[:B, :].set(x)
    else:
        x_in = x
    grid = (B_pad // TB,)

    # ----- honest VMEM budget: double-buffered tiles + resident weights -----
    tile_bytes = 4 * (2 * (TB * in_dim + TB * bottle + 2 * TB * npad)
                      + in_dim * bottle + bottle + bottle * npad + npad)
    vmem_limit = int(min(max(4 << 20, 2 * tile_bytes), 32 << 20))

    out_shapes = (
        jax.ShapeDtypeStruct((B_pad, bottle), jnp.float32),    # bottleneck out
        jax.ShapeDtypeStruct((B_pad, npad), jnp.float32),      # fc out (padded)
        jax.ShapeDtypeStruct((B_pad, npad), jnp.float32),      # softmax (padded)
    )

    batch_spec = lambda shape: pl.BlockSpec(shape, lambda i: (i, 0))
    const_spec = lambda shape: pl.BlockSpec(shape, lambda i: (0, 0))

    h_pad, logits_pad, probs_pad = pl.pallas_call(
        _pointnet_c_kernel,
        out_shape=out_shapes,
        grid=grid,
        in_specs=[
            batch_spec((TB, in_dim)),       # x tile (pipelined over batch)
            const_spec((in_dim, bottle)),   # w1 (VMEM-resident)
            const_spec((1, bottle)),        # b1
            const_spec((bottle, npad)),     # w2 (padded, VMEM-resident)
            const_spec((1, npad)),          # b2 (padded)
        ],
        out_specs=(
            batch_spec((TB, bottle)),
            batch_spec((TB, npad)),
            batch_spec((TB, npad)),
        ),
        compiler_params=pltpu.CompilerParams(
            dimension_semantics=("parallel",),
            vmem_limit_bytes=vmem_limit,
        ),
    )(x_in, w1, b1_r, w2_p, b2_p)

    # Slice batch padding and lane padding back off.
    h = h_pad[:B, :]
    logits = logits_pad[:B, :num_class]
    probs = probs_pad[:B, :num_class]
    return [x, h, logits, probs]


def _reference(x, w1, b1, w2, b2):
    h = x @ w1 + b1
    logits = h @ w2 + b2
    probs = jax.nn.softmax(logits, axis=-1)
    return [x, h, logits, probs]


if __name__ == "__main__":
    # Small shapes consistent with the module: batch=8, in_dim=32,
    # bottle_neck_dim=256, num_class=10.
    B, in_dim, bottle, num_class = 8, 32, 256, 10

    key = jax.random.PRNGKey(0)
    kx, kw1, kb1, kw2, kb2 = jax.random.split(key, 5)

    x = jax.random.normal(kx, (B, in_dim), dtype=jnp.float32)

    # nn.Linear-like uniform init, stored pre-transposed as (in, out).
    s1 = 1.0 / jnp.sqrt(in_dim)
    w1 = jax.random.uniform(kw1, (in_dim, bottle), jnp.float32, -s1, s1)
    b1 = jax.random.uniform(kb1, (bottle,), jnp.float32, -s1, s1)

    s2 = 1.0 / jnp.sqrt(bottle)
    w2 = jax.random.uniform(kw2, (bottle, num_class), jnp.float32, -s2, s2)
    b2 = jax.random.uniform(kb2, (num_class,), jnp.float32, -s2, s2)

    outs = pointnet_c_forward(x, w1, b1, w2, b2)
    outs = jax.block_until_ready(outs)

    refs = _reference(x, w1, b1, w2, b2)
    tols = [(1e-5, 1e-5), (1e-5, 1e-5), (1e-5, 1e-5), (1e-3, 1e-3)]  # approx rcp
    for o, r, (atol, rtol) in zip(outs, refs, tols):
        assert o.shape == r.shape and o.dtype == r.dtype
        assert jnp.allclose(o, r, atol=atol, rtol=rtol)

    print("KERNEL_OK")
</pallas_src>

<mosaic_0001>
module attributes {stable_mosaic.version = 11 : i64} {
  func.func @_pointnet_c_kernel(%arg0: i32, %arg1: memref<8x32xf32, #tpu.memory_space<vmem>>, %arg2: memref<32x256xf32, #tpu.memory_space<vmem>>, %arg3: memref<1x256xf32, #tpu.memory_space<vmem>>, %arg4: memref<256x128xf32, #tpu.memory_space<vmem>>, %arg5: memref<1x128xf32, #tpu.memory_space<vmem>>, %arg6: memref<8x256xf32, #tpu.memory_space<vmem>>, %arg7: memref<8x128xf32, #tpu.memory_space<vmem>>, %arg8: memref<8x128xf32, #tpu.memory_space<vmem>>) attributes {dimension_semantics = [#tpu.dimension_semantics<parallel>], iteration_bounds = array<i64: 1>, scalar_prefetch = 0 : i64, scratch_operands = 0 : i64, tpu.core_type = #tpu.core_type<tc>, window_params = [{transform_indices = @transform_0, window_bounds = array<i64: 8, 32>}, {pipeline_mode = #tpu.pipeline_mode<synchronous>, transform_indices = @transform_1, window_bounds = array<i64: 32, 256>}, {pipeline_mode = #tpu.pipeline_mode<synchronous>, transform_indices = @transform_2, window_bounds = array<i64: 1, 256>}, {pipeline_mode = #tpu.pipeline_mode<synchronous>, transform_indices = @transform_3, window_bounds = array<i64: 256, 128>}, {pipeline_mode = #tpu.pipeline_mode<synchronous>, transform_indices = @transform_4, window_bounds = array<i64: 1, 128>}, {transform_indices = @transform_5, window_bounds = array<i64: 8, 256>}, {transform_indices = @transform_6, window_bounds = array<i64: 8, 128>}, {transform_indices = @transform_7, window_bounds = array<i64: 8, 128>}]} {
    %c0 = arith.constant 0 : index
    %c0_0 = arith.constant 0 : index
    %0 = vector.load %arg1[%c0, %c0_0] : memref<8x32xf32, #tpu.memory_space<vmem>>, vector<8x32xf32>
    %c0_1 = arith.constant 0 : index
    %c0_2 = arith.constant 0 : index
    %1 = vector.load %arg2[%c0_1, %c0_2] : memref<32x256xf32, #tpu.memory_space<vmem>>, vector<32x256xf32>
    %cst = arith.constant dense<0.000000e+00> : vector<8x256xf32>
    %2 = tpu.matmul %0, %1, %cst {dimension_numbers = #tpu.dot_dimension_numbers<[1], [0], [0], [1], [0, 0, 1, 1], [], []>} : vector<8x32xf32>, vector<32x256xf32>, vector<8x256xf32> -> vector<8x256xf32>
    %c0_3 = arith.constant 0 : index
    %c0_4 = arith.constant 0 : index
    %3 = vector.load %arg3[%c0_3, %c0_4] : memref<1x256xf32, #tpu.memory_space<vmem>>, vector<1x256xf32>
    %4 = vector.broadcast %3 : vector<1x256xf32> to vector<8x256xf32>
    %5 = arith.addf %2, %4 : vector<8x256xf32>
    %c0_5 = arith.constant 0 : index
    %c0_6 = arith.constant 0 : index
    %6 = vector.load %arg6[%c0_5, %c0_6] : memref<8x256xf32, #tpu.memory_space<vmem>>, vector<8x256xf32>
    tpu.vector_store %arg6[%c0_5, %c0_6], %5 {strides = array<i32>} : memref<8x256xf32, #tpu.memory_space<vmem>>, vector<8x256xf32>,
    %c0_7 = arith.constant 0 : index
    %c0_8 = arith.constant 0 : index
    %7 = vector.load %arg4[%c0_7, %c0_8] : memref<256x128xf32, #tpu.memory_space<vmem>>, vector<256x128xf32>
    %cst_9 = arith.constant dense<0.000000e+00> : vector<8x128xf32>
    %8 = tpu.matmul %5, %7, %cst_9 {dimension_numbers = #tpu.dot_dimension_numbers<[1], [0], [0], [1], [0, 0, 1, 1], [], []>} : vector<8x256xf32>, vector<256x128xf32>, vector<8x128xf32> -> vector<8x128xf32>
    %c0_10 = arith.constant 0 : index
    %c0_11 = arith.constant 0 : index
    %9 = vector.load %arg5[%c0_10, %c0_11] : memref<1x128xf32, #tpu.memory_space<vmem>>, vector<1x128xf32>
    %10 = vector.broadcast %9 : vector<1x128xf32> to vector<8x128xf32>
    %11 = arith.addf %8, %10 : vector<8x128xf32>
    %c0_12 = arith.constant 0 : index
    %c0_13 = arith.constant 0 : index
    %12 = vector.load %arg7[%c0_12, %c0_13] : memref<8x128xf32, #tpu.memory_space<vmem>>, vector<8x128xf32>
    tpu.vector_store %arg7[%c0_12, %c0_13], %11 {strides = array<i32>} : memref<8x128xf32, #tpu.memory_space<vmem>>, vector<8x128xf32>,
    %cst_14 = arith.constant dense<0xFF800000> : vector<8xf32>
    %13 = vector.multi_reduction <maximumf>, %11, %cst_14 [1] : vector<8x128xf32> to vector<8xf32>
    %14 = vector.shape_cast %13 : vector<8xf32> to vector<8x1xf32>
    %15 = vector.broadcast %14 : vector<8x1xf32> to vector<8x128xf32>
    %16 = arith.subf %11, %15 : vector<8x128xf32>
    %17 = math.exp %16 : vector<8x128xf32>
    %cst_15 = arith.constant dense<0.000000e+00> : vector<8xf32>
    %18 = vector.multi_reduction <add>, %17, %cst_15 [1] : vector<8x128xf32> to vector<8xf32>
    %19 = vector.shape_cast %18 : vector<8xf32> to vector<8x1xf32>
    %20 = tpu.reciprocal %19 {approx = true} : vector<8x1xf32> -> vector<8x1xf32>
    %21 = vector.broadcast %20 : vector<8x1xf32> to vector<8x128xf32>
    %22 = arith.mulf %17, %21 : vector<8x128xf32>
    %c0_16 = arith.constant 0 : index
    %c0_17 = arith.constant 0 : index
    %23 = vector.load %arg8[%c0_16, %c0_17] : memref<8x128xf32, #tpu.memory_space<vmem>>, vector<8x128xf32>
    tpu.vector_store %arg8[%c0_16, %c0_17], %22 {strides = array<i32>} : memref<8x128xf32, #tpu.memory_space<vmem>>, vector<8x128xf32>,
    return
  }
  func.func @transform_0(%arg0: i32) -> (i32, i32) {
    %c0_i32 = arith.constant 0 : i32
    %c0_i32_0 = arith.constant 0 : i32
    return %arg0, %c0_i32 : i32, i32
  }
  func.func @transform_1(%arg0: i32) -> (i32, i32) {
    %c0_i32 = arith.constant 0 : i32
    %c0_i32_0 = arith.constant 0 : i32
    %c0_i32_1 = arith.constant 0 : i32
    return %c0_i32, %c0_i32_0 : i32, i32
  }
  func.func @transform_2(%arg0: i32) -> (i32, i32) {
    %c0_i32 = arith.constant 0 : i32
    %c0_i32_0 = arith.constant 0 : i32
    %c0_i32_1 = arith.constant 0 : i32
    return %c0_i32, %c0_i32_0 : i32, i32
  }
  func.func @transform_3(%arg0: i32) -> (i32, i32) {
    %c0_i32 = arith.constant 0 : i32
    %c0_i32_0 = arith.constant 0 : i32
    %c0_i32_1 = arith.constant 0 : i32
    return %c0_i32, %c0_i32_0 : i32, i32
  }
  func.func @transform_4(%arg0: i32) -> (i32, i32) {
    %c0_i32 = arith.constant 0 : i32
    %c0_i32_0 = arith.constant 0 : i32
    %c0_i32_1 = arith.constant 0 : i32
    return %c0_i32, %c0_i32_0 : i32, i32
  }
  func.func @transform_5(%arg0: i32) -> (i32, i32) {
    %c0_i32 = arith.constant 0 : i32
    %c0_i32_0 = arith.constant 0 : i32
    return %arg0, %c0_i32 : i32, i32
  }
  func.func @transform_6(%arg0: i32) -> (i32, i32) {
    %c0_i32 = arith.constant 0 : i32
    %c0_i32_0 = arith.constant 0 : i32
    return %arg0, %c0_i32 : i32, i32
  }
  func.func @transform_7(%arg0: i32) -> (i32, i32) {
    %c0_i32 = arith.constant 0 : i32
    %c0_i32_0 = arith.constant 0 : i32
    return %arg0, %c0_i32 : i32, i32
  }
}

</mosaic_0001>

<llo_original>
// kernel: tpu_custom_call.1
$region0: #{tpu_custom_call.1}
  #allocation0 [shape = 'u32[]', space=smem, size = 0x4, offset = 0x4, fixed_abs, tag = 'smem constant byte address 0x4 - core index']
  #allocation1 [shape = 'u32[144,128]{1,0:T(1,128)}', space=vmem, size = 0x12000, scoped, tag = 'internal scratch']
  %s0 = inlined_call_operand.hbm [shape: f32[8,32], index: 0, kind: input, shape index: {}]
  %s1 = inlined_call_operand.hbm [shape: f32[32,256], index: 1, kind: input, shape index: {}]
  %s2 = inlined_call_operand.vmem [shape: f32[1,256], index: 2, kind: input, shape index: {}]
  %s3 = inlined_call_operand.hbm [shape: f32[256,128], index: 3, kind: input, shape index: {}]
  %s4 = inlined_call_operand.vmem [shape: f32[1,128], index: 4, kind: input, shape index: {}]
  %s5 = inlined_call_operand.hbm [shape: f32[8,256], index: 5, kind: output, shape index: {0}]
  %s6 = inlined_call_operand.hbm [shape: f32[8,128], index: 6, kind: output, shape index: {1}]
  %s7 = inlined_call_operand.hbm [shape: f32[8,128], index: 7, kind: output, shape index: {2}]
  %8 = xla_tuple %s5, %s6, %s7
  %s9 = sld [smem:[#allocation0]]
  $region58: #{tpu_custom_call.1} parent=0
    _
  %s11 = ssub.s32 1, %s9
  %s12 = scalar_select 0, %s11, %s9
  $region1: #{tpu_custom_call.1} parent=0
    #allocation2 [shape = 'u8[4096]{0}', space=vmem, size = 0x1000, scoped, tag = 'input window, operand 0, single buffered']
    #allocation3 [shape = 's32[1]{0}', space=sflag, size = 0x4, scoped, tag = 'scoped memory for tpu_custom_call.1']
    #allocation4 [shape = 's32[1]{0}', space=sflag, size = 0x4, scoped, tag = 'scoped memory for tpu_custom_call.1']
    #allocation5 [shape = 'u8[32768]{0}', space=vmem, size = 0x8000, scoped, tag = 'input window, operand 1, single buffered']
    #allocation6 [shape = 's32[1]{0}', space=sflag, size = 0x4, scoped, tag = 'scoped memory for tpu_custom_call.1']
    #allocation7 [shape = 'u8[131072]{0}', space=vmem, size = 0x20000, scoped, tag = 'input window, operand 3, single buffered']
    #allocation8 [shape = 'u8[8192]{0}', space=vmem, size = 0x2000, scoped, tag = 'output window, operand 0, single buffered']
    #allocation9 [shape = 'u8[4096]{0}', space=vmem, size = 0x1000, scoped, tag = 'output window, operand 1, single buffered']
    #allocation10 [shape = 's32[1]{0}', space=sflag, size = 0x4, scoped, tag = 'scoped memory for tpu_custom_call.1']
    #allocation11 [shape = 'u8[4096]{0}', space=vmem, size = 0x1000, scoped, tag = 'output window, operand 2, single buffered']
    %13 = vsyncpa [#allocation3], 0
    %14 = vsyncpa [#allocation6], 0
    %15 = vsyncpa [#allocation4], 0
    %16 = vsyncpa [#allocation10], 0
    // Predicated region
    $region2: #{tpu_custom_call.1} parent=1 // pred_check
      _
    $region3: #{tpu_custom_call.1} parent=1 // pred_check_branch
      %18 = sbr.rel (0) target = $region5
    $region4: #{tpu_custom_call.1} parent=1 // pred_region
      %s20 = ssub.s32 128, 128
      %21 = vsyncadd [#allocation3], %s20
      %s23 = sshll.u32 [#allocation2], 4
      %s24 = int_to_ptr.vmem [resolvable:$true] %s23
      %26 = dma.hbm_to_vmem [thread:$0]  %s0, 128, %s24, [#allocation3]
    $region5: #{tpu_custom_call.1} parent=1 // pred_fallthru
      _
    // Predicated region
    $region6: #{tpu_custom_call.1} parent=1 // pred_check
      _
    $region7: #{tpu_custom_call.1} parent=1 // pred_check_branch
      %28 = sbr.rel (0) target = $region9
    $region8: #{tpu_custom_call.1} parent=1 // pred_region
      %s30 = ssub.s32 1024, 1024
      %31 = vsyncadd [#allocation6], %s30
      %s32 = sshll.u32 [#allocation5], 4
      %s33 = int_to_ptr.vmem [resolvable:$true] %s32
      %38 = dma.hbm_to_vmem [thread:$0]  %s1, 1024, %s33, [#allocation6], 256, 256, 16
    $region9: #{tpu_custom_call.1} parent=1 // pred_fallthru
      _
    // Predicated region
    $region10: #{tpu_custom_call.1} parent=1 // pred_check
      _
    $region11: #{tpu_custom_call.1} parent=1 // pred_check_branch
      %40 = sbr.rel (0) target = $region13
    $region12: #{tpu_custom_call.1} parent=1 // pred_region
      _
    $region13: #{tpu_custom_call.1} parent=1 // pred_fallthru
      _
    // Predicated region
    $region14: #{tpu_custom_call.1} parent=1 // pred_check
      _
    $region15: #{tpu_custom_call.1} parent=1 // pred_check_branch
      %42 = sbr.rel (0) target = $region17
    $region16: #{tpu_custom_call.1} parent=1 // pred_region
      %s44 = ssub.s32 4096, 4096
      %45 = vsyncadd [#allocation6], %s44
      %s46 = sshll.u32 [#allocation7], 4
      %s47 = int_to_ptr.vmem [resolvable:$true] %s46
      %52 = dma.hbm_to_vmem [thread:$0]  %s3, 4096, %s47, [#allocation6], 128, 128, 8
    $region17: #{tpu_custom_call.1} parent=1 // pred_fallthru
      _
    // Predicated region
    $region18: #{tpu_custom_call.1} parent=1 // pred_check
      _
    $region19: #{tpu_custom_call.1} parent=1 // pred_check_branch
      %54 = sbr.rel (0) target = $region21
    $region20: #{tpu_custom_call.1} parent=1 // pred_region
      _
    $region21: #{tpu_custom_call.1} parent=1 // pred_fallthru
      _
    // Predicated region
    $region22: #{tpu_custom_call.1} parent=1 // pred_check
      _
    $region23: #{tpu_custom_call.1} parent=1 // pred_check_branch
      %56 = sbr.rel (0) target = $region25
    $region24: #{tpu_custom_call.1} parent=1 // pred_region
      %57 = dma.done [#allocation3], 128
    $region25: #{tpu_custom_call.1} parent=1 // pred_fallthru
      _
    // Predicated region
    $region26: #{tpu_custom_call.1} parent=1 // pred_check
      _
    $region27: #{tpu_custom_call.1} parent=1 // pred_check_branch
      %59 = sbr.rel (0) target = $region29
    $region28: #{tpu_custom_call.1} parent=1 // pred_region
      %60 = dma.done [#allocation6], 1024
    $region29: #{tpu_custom_call.1} parent=1 // pred_fallthru
      _
    // Predicated region
    $region30: #{tpu_custom_call.1} parent=1 // pred_check
      _
    $region31: #{tpu_custom_call.1} parent=1 // pred_check_branch
      %62 = sbr.rel (0) target = $region33
    $region32: #{tpu_custom_call.1} parent=1 // pred_region
      %63 = dma.done [#allocation6], 4096
    $region33: #{tpu_custom_call.1} parent=1 // pred_fallthru
      _
    %v64 = vld [vmem:[#allocation2] sm:$0xff]
    %v65 = vld [vmem:[#allocation5] sm:$0xff]
    %v66 = vld [vmem:[#allocation5 + $0x8] sm:$0xff]
    %v67 = vld [vmem:[#allocation5 + $0x10] sm:$0xff]
    %v68 = vld [vmem:[#allocation5 + $0x18] sm:$0xff]
    %v69 = vld [vmem:[#allocation5 + $0x20] sm:$0xff]
    %v70 = vld [vmem:[#allocation5 + $0x28] sm:$0xff]
    %v71 = vld [vmem:[#allocation5 + $0x30] sm:$0xff]
    %v72 = vld [vmem:[#allocation5 + $0x38] sm:$0xff]
    %v73 = vld [vmem:[%s2] sm:$0x3]
    %v75 = vlaneseq
    %v76 = vshrl.u32 %v75, 7
    %v77 = vsub.s32 0, %v76
    %v78 = vrot.slane %v73, %v77
    %v79 = vlaneseq
    %v80 = vshrl.u32 %v79, 7
    %v81 = vsub.s32 1, %v80
    %v82 = vrot.slane %v73, %v81
    %vm85 = vcmask 261120
    %v87 = vsel %vm85, %v64, 0
    %89 = vmatprep.subr.mxu0 0.0
    %90 = vmatpush1.msra.mxu0 0.0
    %91 = vmatprep.subr.mxu0 0.0
    %92 = vmatpush1.msra.mxu0 0.0
    %93 = vmatprep.subr.mxu0 0.0
    %94 = vmatpush1.msra.mxu0 0.0
    %95 = vmatprep.subr.mxu0 0.0
    %96 = vmatpush1.msra.mxu0 0.0
    %97 = vmatprep.subr.mxu0 0.0
    %98 = vmatpush1.msra.mxu0 0.0
    %99 = vmatprep.subr.mxu0 0.0
    %100 = vmatpush1.msra.mxu0 0.0
    %101 = vmatprep.subr.mxu0 0.0
    %102 = vmatpush1.msra.mxu0 0.0
    %103 = vmatprep.subr.mxu0 0.0
    %104 = vmatpush1.msra.mxu0 0.0
    %105 = vmatprep.subr.mxu0 0.0
    %106 = vmatpush1.msra.mxu0 0.0
    %107 = vmatprep.subr.mxu0 0.0
    %108 = vmatpush1.msra.mxu0 0.0
    %109 = vmatprep.subr.mxu0 0.0
    %110 = vmatpush1.msra.mxu0 0.0
    %111 = vmatprep.subr.mxu0 0.0
    %112 = vmatpush1.msra.mxu0 0.0
    %113 = vmatprep.subr.mxu0 %v72
    %114 = vmatpush1.msra.mxu0 %v71
    %115 = vmatprep.subr.mxu0 %v70
    %116 = vmatpush1.msra.mxu0 %v69
    %117 = vmatprep.subr.mxu0 %v68
    %118 = vmatpush1.msra.mxu0 %v67
    %119 = vmatprep.subr.mxu0 %v66
    %120 = vmatpush1.msra.mxu0 %v65
    %121 = vmatprep.subr.mxu0 0.0
    %122 = vmatpush2.msra.mxu0 0.0
    %123 = vmatprep.subr.mxu0 0.0
    %124 = vmatpush2.msra.mxu0 0.0
    %125 = vmatprep.subr.mxu0 0.0
    %126 = vmatpush2.msra.mxu0 0.0
    %127 = vmatprep.subr.mxu0 0.0
    %128 = vmatpush2.msra.mxu0 0.0
    %129 = vmatprep.subr.mxu0 0.0
    %130 = vmatpush2.msra.mxu0 0.0
    %131 = vmatprep.subr.mxu0 0.0
    %132 = vmatpush2.msra.mxu0 0.0
    %133 = vmatprep.subr.mxu0 0.0
    %134 = vmatpush2.msra.mxu0 0.0
    %135 = vmatprep.subr.mxu0 0.0
    %136 = vmatpush2.msra.mxu0 0.0
    %137 = vmatprep.subr.mxu0 0.0
    %138 = vmatpush2.msra.mxu0 0.0
    %139 = vmatprep.subr.mxu0 0.0
    %140 = vmatpush2.msra.mxu0 0.0
    %141 = vmatprep.subr.mxu0 0.0
    %142 = vmatpush2.msra.mxu0 0.0
    %143 = vmatprep.subr.mxu0 0.0
    %144 = vmatpush2.msra.mxu0 0.0
    %145 = vmatprep.subr.mxu0 0.0
    %146 = vmatpush2.msra.mxu0 0.0
    %147 = vmatprep.subr.mxu0 0.0
    %148 = vmatpush2.msra.mxu0 0.0
    %149 = vmatprep.subr.mxu0 0.0
    %150 = vmatpush2.msra.mxu0 0.0
    %151 = vmatprep.subr.mxu0 0.0
    %152 = vmatpush2.msra.mxu0 0.0
    %153 = vmatprep.mubr.f32.mxu0 0.0
    %154 = vmatmul.mubr.f32.gmra.mxu0 %v87
    %v155 = vpop.f32.mrf.mxu0
    %v156 = vadd.f32 %v78, %v155
    %v157 = vpop.f32.mrf.mxu0
    %v158 = vadd.f32 %v82, %v157
    %159 = vdwg.mxu0
    %160 = vst [vmem:[#allocation8] sm:$0xff] %v156
    %161 = vst [vmem:[#allocation8 + $0x8] sm:$0xff] %v158
    %v162 = vld [vmem:[#allocation7] sm:$0xff]
    %v163 = vld [vmem:[#allocation7 + $0x8] sm:$0xff]
    %v164 = vld [vmem:[#allocation7 + $0x10] sm:$0xff]
    %v165 = vld [vmem:[#allocation7 + $0x18] sm:$0xff]
    %v166 = vld [vmem:[#allocation7 + $0x20] sm:$0xff]
    %v167 = vld [vmem:[#allocation7 + $0x28] sm:$0xff]
    %v168 = vld [vmem:[#allocation7 + $0x30] sm:$0xff]
    %v169 = vld [vmem:[#allocation7 + $0x38] sm:$0xff]
    %v170 = vld [vmem:[#allocation7 + $0x40] sm:$0xff]
    %v171 = vld [vmem:[#allocation7 + $0x48] sm:$0xff]
    %v172 = vld [vmem:[#allocation7 + $0x50] sm:$0xff]
    %v173 = vld [vmem:[#allocation7 + $0x58] sm:$0xff]
    %v174 = vld [vmem:[#allocation7 + $0x60] sm:$0xff]
    %v175 = vld [vmem:[#allocation7 + $0x68] sm:$0xff]
    %v176 = vld [vmem:[#allocation7 + $0x70] sm:$0xff]
    %v177 = vld [vmem:[#allocation7 + $0x78] sm:$0xff]
    %v178 = vld [vmem:[#allocation7 + $0x80] sm:$0xff]
    %v179 = vld [vmem:[#allocation7 + $0x88] sm:$0xff]
    %v180 = vld [vmem:[#allocation7 + $0x90] sm:$0xff]
    %v181 = vld [vmem:[#allocation7 + $0x98] sm:$0xff]
    %v182 = vld [vmem:[#allocation7 + $0xa0] sm:$0xff]
    %v183 = vld [vmem:[#allocation7 + $0xa8] sm:$0xff]
    %v184 = vld [vmem:[#allocation7 + $0xb0] sm:$0xff]
    %v185 = vld [vmem:[#allocation7 + $0xb8] sm:$0xff]
    %v186 = vld [vmem:[#allocation7 + $0xc0] sm:$0xff]
    %v187 = vld [vmem:[#allocation7 + $0xc8] sm:$0xff]
    %v188 = vld [vmem:[#allocation7 + $0xd0] sm:$0xff]
    %v189 = vld [vmem:[#allocation7 + $0xd8] sm:$0xff]
    %v190 = vld [vmem:[#allocation7 + $0xe0] sm:$0xff]
    %v191 = vld [vmem:[#allocation7 + $0xe8] sm:$0xff]
    %v192 = vld [vmem:[#allocation7 + $0xf0] sm:$0xff]
    %v193 = vld [vmem:[#allocation7 + $0xf8] sm:$0xff]
    %v194 = vld [vmem:[%s4] sm:$0x1]
    %v196 = vlaneseq
    %v197 = vshrl.u32 %v196, 7
    %v198 = vsub.s32 0, %v197
    %v199 = vrot.slane %v194, %v198
    %201 = vmatprep.subr.mxu0 0.0
    %202 = vmatpush1.msra.mxu0 %v177
    %203 = vmatprep.subr.mxu0 0.0
    %204 = vmatpush1.msra.mxu0 %v176
    %205 = vmatprep.subr.mxu0 0.0
    %206 = vmatpush1.msra.mxu0 %v175
    %207 = vmatprep.subr.mxu0 0.0
    %208 = vmatpush1.msra.mxu0 %v174
    %209 = vmatprep.subr.mxu0 0.0
    %210 = vmatpush1.msra.mxu0 %v173
    %211 = vmatprep.subr.mxu0 0.0
    %212 = vmatpush1.msra.mxu0 %v172
    %213 = vmatprep.subr.mxu0 0.0
    %214 = vmatpush1.msra.mxu0 %v171
    %215 = vmatprep.subr.mxu0 0.0
    %216 = vmatpush1.msra.mxu0 %v170
    %217 = vmatprep.subr.mxu0 0.0
    %218 = vmatpush1.msra.mxu0 %v169
    %219 = vmatprep.subr.mxu0 0.0
    %220 = vmatpush1.msra.mxu0 %v168
    %221 = vmatprep.subr.mxu0 0.0
    %222 = vmatpush1.msra.mxu0 %v167
    %223 = vmatprep.subr.mxu0 0.0
    %224 = vmatpush1.msra.mxu0 %v166
    %225 = vmatprep.subr.mxu0 0.0
    %226 = vmatpush1.msra.mxu0 %v165
    %227 = vmatprep.subr.mxu0 0.0
    %228 = vmatpush1.msra.mxu0 %v164
    %229 = vmatprep.subr.mxu0 0.0
    %230 = vmatpush1.msra.mxu0 %v163
    %231 = vmatprep.subr.mxu0 0.0
    %232 = vmatpush1.msra.mxu0 %v162
    %233 = vmatprep.subr.mxu0 0.0
    %234 = vmatpush2.msra.mxu0 %v193
    %235 = vmatprep.subr.mxu0 0.0
    %236 = vmatpush2.msra.mxu0 %v192
    %237 = vmatprep.subr.mxu0 0.0
    %238 = vmatpush2.msra.mxu0 %v191
    %239 = vmatprep.subr.mxu0 0.0
    %240 = vmatpush2.msra.mxu0 %v190
    %241 = vmatprep.subr.mxu0 0.0
    %242 = vmatpush2.msra.mxu0 %v189
    %243 = vmatprep.subr.mxu0 0.0
    %244 = vmatpush2.msra.mxu0 %v188
    %245 = vmatprep.subr.mxu0 0.0
    %246 = vmatpush2.msra.mxu0 %v187
    %247 = vmatprep.subr.mxu0 0.0
    %248 = vmatpush2.msra.mxu0 %v186
    %249 = vmatprep.subr.mxu0 0.0
    %250 = vmatpush2.msra.mxu0 %v185
    %251 = vmatprep.subr.mxu0 0.0
    %252 = vmatpush2.msra.mxu0 %v184
    %253 = vmatprep.subr.mxu0 0.0
    %254 = vmatpush2.msra.mxu0 %v183
    %255 = vmatprep.subr.mxu0 0.0
    %256 = vmatpush2.msra.mxu0 %v182
    %257 = vmatprep.subr.mxu0 0.0
    %258 = vmatpush2.msra.mxu0 %v181
    %259 = vmatprep.subr.mxu0 0.0
    %260 = vmatpush2.msra.mxu0 %v180
    %261 = vmatprep.subr.mxu0 0.0
    %262 = vmatpush2.msra.mxu0 %v179
    %263 = vmatprep.subr.mxu0 0.0
    %264 = vmatpush2.msra.mxu0 %v178
    %265 = vmatprep.mubr.f32.mxu0 %v158
    %266 = vmatmul.mubr.f32.gmra.mxu0 %v156
    %v267 = vpop.f32.mrf.mxu0
    %v268 = vadd.f32 %v199, %v267
    %v269 = vpop.f32.mrf.mxu0
    %270 = vdwg.mxu0
    %271 = vst [vmem:[#allocation9] sm:$0xff] %v268
    %272 = vmax.xlane.f32.xlu0 %v268
    %v273 = vpop.xlane.xlu0 %272
    %v274 = vsub.f32 %v268, %v273
    %v275 = vmul.f32 %v274, 1.442695
    %v276 = vpow.pop %v275
    %277 = vadd.xlane.f32.xlu0 %v276
    %v278 = vpop.xlane.xlu0 %277
    %v279 = vrcp.pop %v278
    %v280 = vmul.f32 %v276, %v279
    %281 = vst [vmem:[#allocation11] sm:$0xff] %v280
    // Predicated region
    $region34: #{tpu_custom_call.1} parent=1 // pred_check
      _
    $region35: #{tpu_custom_call.1} parent=1 // pred_check_branch
      %283 = sbr.rel (0) target = $region37
    $region36: #{tpu_custom_call.1} parent=1 // pred_region
      %s285 = ssub.s32 256, 256
      %286 = vsyncadd [#allocation4], %s285
      %s288 = sshll.u32 [#allocation8], 4
      %s289 = int_to_ptr.vmem [resolvable:$true] %s288
      %291 = dma.vmem_to_hbm [thread:$0]  %s289, 256, %s5, [#allocation4]
    $region37: #{tpu_custom_call.1} parent=1 // pred_fallthru
      _
    // Predicated region
    $region38: #{tpu_custom_call.1} parent=1 // pred_check
      _
    $region39: #{tpu_custom_call.1} parent=1 // pred_check_branch
      %293 = sbr.rel (0) target = $region41
    $region40: #{tpu_custom_call.1} parent=1 // pred_region
      %s295 = ssub.s32 128, 128
      %296 = vsyncadd [#allocation10], %s295
      %s298 = sshll.u32 [#allocation9], 4
      %s299 = int_to_ptr.vmem [resolvable:$true] %s298
      %301 = dma.vmem_to_hbm [thread:$0]  %s299, 128, %s6, [#allocation10]
    $region41: #{tpu_custom_call.1} parent=1 // pred_fallthru
      _
    // Predicated region
    $region42: #{tpu_custom_call.1} parent=1 // pred_check
      _
    $region43: #{tpu_custom_call.1} parent=1 // pred_check_branch
      %303 = sbr.rel (0) target = $region45
    $region44: #{tpu_custom_call.1} parent=1 // pred_region
      %s305 = ssub.s32 128, 128
      %306 = vsyncadd [#allocation10], %s305
      %s308 = sshll.u32 [#allocation11], 4
      %s309 = int_to_ptr.vmem [resolvable:$true] %s308
      %311 = dma.vmem_to_hbm [thread:$0]  %s309, 128, %s7, [#allocation10]
    $region45: #{tpu_custom_call.1} parent=1 // pred_fallthru
      _
    // Predicated region
    $region46: #{tpu_custom_call.1} parent=1 // pred_check
      _
    $region47: #{tpu_custom_call.1} parent=1 // pred_check_branch
      %313 = sbr.rel (0) target = $region49
    $region48: #{tpu_custom_call.1} parent=1 // pred_region
      %314 = dma.done [#allocation4], 256
    $region49: #{tpu_custom_call.1} parent=1 // pred_fallthru
      _
    // Predicated region
    $region50: #{tpu_custom_call.1} parent=1 // pred_check
      _
    $region51: #{tpu_custom_call.1} parent=1 // pred_check_branch
      %316 = sbr.rel (0) target = $region53
    $region52: #{tpu_custom_call.1} parent=1 // pred_region
      %317 = dma.done [#allocation10], 128
    $region53: #{tpu_custom_call.1} parent=1 // pred_fallthru
      _
    // Predicated region
    $region54: #{tpu_custom_call.1} parent=1 // pred_check
      _
    $region55: #{tpu_custom_call.1} parent=1 // pred_check_branch
      %319 = sbr.rel (0) target = $region57
    $region56: #{tpu_custom_call.1} parent=1 // pred_region
      %320 = dma.done [#allocation10], 128
    $region57: #{tpu_custom_call.1} parent=1 // pred_fallthru
      _
    %321 = vsyncpa [#allocation3], 1
    %322 = vsyncpa [#allocation6], 1
    %323 = vsyncpa [#allocation4], 1
    %324 = vsyncpa [#allocation10], 1

</llo_original>
